<compile_context>
chip_gen: v5e
topology: v5e:2x2
jax: 0.10.0
libtpu: 0.0.40
codegen_flags: <defaults>
</compile_context>

<pallas_src>
import functools

import jax
import jax.numpy as jnp
from jax.experimental import pallas as pl
from jax.experimental.pallas import tpu as pltpu

_ACTIVATIONS = ("relu", "gelu", "sigmoid", "tanh", "softplus")


def _apply_activation(y, activation):
    if activation == "relu":
        return jnp.maximum(y, 0.0)
    if activation == "gelu":
        return jax.nn.gelu(y)
    if activation == "sigmoid":
        return jax.nn.sigmoid(y)
    if activation == "tanh":
        return jnp.tanh(y)
    if activation == "softplus":
        return jax.nn.softplus(y)
    raise ValueError(f"unknown activation {activation!r}")


# ----------------------------------------------------------------------------- kernels
def _linear_act_kernel(x_ref, w_ref, b_ref, o_ref, *, activation):
    # x_ref: [TB, D] native dtype   w_ref: [1, D] f32 (resident)   b_ref: [1, 1] f32 SMEM
    x = x_ref[...].astype(jnp.float32)
    w = w_ref[...].astype(jnp.float32)                   # (1, D) broadcasts over (TB, D)
    # VPU elementwise multiply + XLU lane reduction; MXU is wasted at N=1.
    y = jnp.sum(x * w, axis=-1, keepdims=True) + b_ref[0, 0]
    o_ref[...] = _apply_activation(y, activation).astype(o_ref.dtype)


def _linear_act_kernel_ksplit(x_ref, w_ref, b_ref, o_ref, acc_ref, *,
                              activation, d_total, tk):
    # Feature dim split across the trailing ("arbitrary") grid axis; f32 accumulator.
    k = pl.program_id(1)

    @pl.when(k == 0)
    def _init():
        acc_ref[...] = jnp.zeros_like(acc_ref)

    x = x_ref[...].astype(jnp.float32)
    w = w_ref[...].astype(jnp.float32)
    p = x * w
    # The last K block may run past the true feature dim; mask the garbage columns.
    col = k * tk + jax.lax.broadcasted_iota(jnp.int32, p.shape, 1)
    p = jnp.where(col < d_total, p, 0.0)
    acc_ref[...] += jnp.sum(p, axis=-1, keepdims=True)

    @pl.when(k == pl.num_programs(1) - 1)
    def _finalize():
        y = acc_ref[...] + b_ref[0, 0]
        o_ref[...] = _apply_activation(y, activation).astype(o_ref.dtype)


# ------------------------------------------------------------------------ tiling policy
def _cdiv(a, b):
    return -(-a // b)


def _round_up(a, m):
    return _cdiv(a, m) * m


def _sublane_multiple(dtype):
    bits = jnp.dtype(dtype).itemsize * 8
    if bits >= 32:
        return 8
    if bits == 16:
        return 16
    return 32


def _vmem_capacity_bytes():
    try:
        info_fn = getattr(pltpu, "get_tpu_info", None)
        if info_fn is not None:
            cap = getattr(info_fn(), "vmem_capacity_bytes", None)
            if cap:
                return int(cap)
    except Exception:
        pass
    return 64 * 1024 * 1024      # conservative default: v7x per-TensorCore VMEM


def _default_budget_bytes():
    # Working-set target (x double buffer + weight + out + f32 temporaries):
    # ~half of physical VMEM, capped at 48 MiB -> 48 MiB on v5e/v6e, 32 MiB on v7x.
    return min(_vmem_capacity_bytes() // 2, 48 * 1024 * 1024)


def _vmem_limit_bytes(budget):
    cap = _vmem_capacity_bytes()
    return int(max(16 * 1024 * 1024, min(cap - (8 << 20), budget + (16 << 20))))


def _plan_tiles(B, D, itemsize, sub, budget):
    """Returns (TB, TK); TK == D means the single-pass (no K-split) path."""
    w_bytes = 2 * D * 4                                # resident weight (double-buffered)
    per_row = 2 * D * itemsize + 2 * D * 4 + 8         # x stream + f32 temps + out
    if w_bytes + sub * per_row <= budget:
        tb = ((budget - w_bytes) // per_row // sub) * sub
        # Don't tile past the batch; keep >= 2 grid steps so both v7x TCs get work.
        tb = min(tb, max(sub, _round_up(_cdiv(B, 2), sub)), _round_up(B, sub))
        return max(tb, sub), D
    # K-split: feature dim too large for a single VMEM block even at TB == sub.
    tb = max(sub, min(_round_up(_cdiv(B, 2), sub), _round_up(B, sub), 256))
    per_col = tb * (2 * itemsize + 2 * 4) + 2 * 4      # x stream + f32 temps + weight
    tk = ((budget - 3 * tb * 4) // per_col // 128) * 128   # minus out + accumulator
    tk = max(128, min(tk, _round_up(D, 128)))
    return tb, tk


# ----------------------------------------------------------------------------- wrapper
def linear_estimator_forward(x, weight, bias, activation="sigmoid", *,
                             vmem_budget_bytes=None):
    """x: [B, ...] flattened to [B, D]; weight: [1, D] (or [D]); bias: [1]. Returns [B, 1] f32."""
    if activation not in _ACTIVATIONS:
        raise ValueError(f"unknown activation {activation!r}")
    B = x.shape[0]
    x2 = x.reshape(B, -1)                              # stream in native dtype
    D = x2.shape[1]
    itemsize = jnp.dtype(x2.dtype).itemsize
    sub = _sublane_multiple(x2.dtype)

    w = jnp.asarray(weight, jnp.float32).reshape(1, D)   # lane-dense [1, D], stays resident
    b = jnp.asarray(bias, jnp.float32).reshape(1, 1)     # scalar bias -> SMEM

    budget = _default_budget_bytes() if vmem_budget_bytes is None else int(vmem_budget_bytes)
    tb, tk = _plan_tiles(B, D, itemsize, sub, budget)
    n_b = _cdiv(B, tb)

    cost = pl.CostEstimate(
        flops=2 * B * D,
        bytes_accessed=B * D * itemsize + D * 4 + 4 + B * 4,
        transcendentals=0 if activation == "relu" else B,
    )
    out_shape = jax.ShapeDtypeStruct((B, 1), jnp.float32)

    if tk == D:
        # Single pass over the feature dim; batch-tiled, software-pipelined x stream.
        kernel = functools.partial(_linear_act_kernel, activation=activation)
        grid_spec = pltpu.PrefetchScalarGridSpec(
            num_scalar_prefetch=0,
            grid=(n_b,),
            in_specs=[
                pl.BlockSpec((tb, D), lambda i: (i, 0)),                 # x stream
                pl.BlockSpec((1, D), lambda i: (0, 0)),                  # weight (resident)
                pl.BlockSpec(memory_space=pltpu.MemorySpace.SMEM),       # bias scalar
            ],
            out_specs=pl.BlockSpec((tb, 1), lambda i: (i, 0)),
        )
        dims = ("parallel",)
    else:
        # K-split path for very large feature dims (half the D threshold on v7x's 64 MiB).
        n_k = _cdiv(D, tk)
        kernel = functools.partial(_linear_act_kernel_ksplit,
                                   activation=activation, d_total=D, tk=tk)
        grid_spec = pltpu.PrefetchScalarGridSpec(
            num_scalar_prefetch=0,
            grid=(n_b, n_k),
            in_specs=[
                pl.BlockSpec((tb, tk), lambda i, k: (i, k)),             # x stream
                pl.BlockSpec((1, tk), lambda i, k: (0, k)),              # weight tile
                pl.BlockSpec(memory_space=pltpu.MemorySpace.SMEM),       # bias scalar
            ],
            out_specs=pl.BlockSpec((tb, 1), lambda i, k: (i, 0)),        # resident over k
            scratch_shapes=[pltpu.VMEM((tb, 1), jnp.float32)],           # f32 accumulator
        )
        dims = ("parallel", "arbitrary")

    return pl.pallas_call(
        kernel,
        out_shape=out_shape,
        grid_spec=grid_spec,
        compiler_params=pltpu.CompilerParams(
            dimension_semantics=dims,
            vmem_limit_bytes=_vmem_limit_bytes(budget),
        ),
        cost_estimate=cost,
    )(x2, w, b)


if __name__ == "__main__":
    key = jax.random.PRNGKey(0)
    kx, kw = jax.random.split(key)

    # Small 4-D input to exercise the x.view(B, -1) flatten: B=2, D = 4*16*16 = 1024.
    B, C, H, W = 2, 4, 16, 16
    x = jax.random.normal(kx, (B, C, H, W), dtype=jnp.float32)
    D = C * H * W

    # Parameter init matching the module: weight ~ Normal(0, 0.01), bias = 0.
    weight = 0.01 * jax.random.normal(kw, (1, D), dtype=jnp.float32)
    bias = jnp.zeros((1,), dtype=jnp.float32)

    ref = jax.nn.sigmoid(x.reshape(B, -1) @ weight.T + bias)

    # Main path: single feature-pass, batch-tiled grid (no wrapper-side padding).
    out = jax.block_until_ready(
        linear_estimator_forward(x, weight, bias, activation="sigmoid"))
    assert out.shape == (B, 1)
    assert jnp.allclose(out, ref, atol=1e-5, rtol=1e-5)

    # Exercise the large-D K-split path by forcing a tiny VMEM budget; same numerics.
    out_ks = jax.block_until_ready(
        linear_estimator_forward(x, weight, bias, activation="sigmoid",
                                 vmem_budget_bytes=64 * 1024))
    assert jnp.allclose(out_ks, ref, atol=1e-5, rtol=1e-5)

    print("KERNEL_OK")
</pallas_src>

<mosaic_0001>
module attributes {stable_mosaic.version = 11 : i64} {
  func.func @_linear_act_kernel(%arg0: i32, %arg1: memref<8x1024xf32, #tpu.memory_space<vmem>>, %arg2: memref<1x1024xf32, #tpu.memory_space<vmem>>, %arg3: memref<1x1xf32, #tpu.memory_space<smem>>, %arg4: memref<8x1xf32, #tpu.memory_space<vmem>>) attributes {dimension_semantics = [#tpu.dimension_semantics<parallel>], iteration_bounds = array<i64: 1>, scalar_prefetch = 0 : i64, scratch_operands = 0 : i64, tpu.core_type = #tpu.core_type<tc>, window_params = [{transform_indices = @transform_0, window_bounds = array<i64: 8, 1024>}, {pipeline_mode = #tpu.pipeline_mode<synchronous>, transform_indices = @transform_1, window_bounds = array<i64: 1, 1024>}, {transform_indices = @transform_2, window_bounds = array<i64: 1, 1>}, {transform_indices = @transform_3, window_bounds = array<i64: 8, 1>}]} {
    %c0 = arith.constant 0 : index
    %c0_0 = arith.constant 0 : index
    %0 = vector.load %arg1[%c0, %c0_0] : memref<8x1024xf32, #tpu.memory_space<vmem>>, vector<8x1024xf32>
    %c0_1 = arith.constant 0 : index
    %c0_2 = arith.constant 0 : index
    %1 = vector.load %arg2[%c0_1, %c0_2] : memref<1x1024xf32, #tpu.memory_space<vmem>>, vector<1x1024xf32>
    %2 = vector.broadcast %1 : vector<1x1024xf32> to vector<8x1024xf32>
    %3 = arith.mulf %0, %2 : vector<8x1024xf32>
    %cst = arith.constant dense<0.000000e+00> : vector<8xf32>
    %4 = vector.multi_reduction <add>, %3, %cst [1] : vector<8x1024xf32> to vector<8xf32>
    %5 = vector.shape_cast %4 : vector<8xf32> to vector<8x1xf32>
    %c0_3 = arith.constant 0 : index
    %c0_4 = arith.constant 0 : index
    %6 = memref.load %arg3[%c0_3, %c0_4] : memref<1x1xf32, #tpu.memory_space<smem>>
    %7 = vector.broadcast %6 : f32 to vector<8x1xf32>
    %8 = arith.addf %5, %7 : vector<8x1xf32>
    %9 = arith.negf %8 : vector<8x1xf32>
    %10 = math.exp %9 : vector<8x1xf32>
    %cst_5 = arith.constant 1.000000e+00 : f32
    %11 = vector.broadcast %cst_5 : f32 to vector<8x1xf32>
    %12 = arith.addf %11, %10 : vector<8x1xf32>
    %13 = arith.divf %11, %12 : vector<8x1xf32>
    %c0_6 = arith.constant 0 : index
    %c0_7 = arith.constant 0 : index
    %14 = vector.load %arg4[%c0_6, %c0_7] : memref<8x1xf32, #tpu.memory_space<vmem>>, vector<8x1xf32>
    tpu.vector_store %arg4[%c0_6, %c0_7], %13 {strides = array<i32>} : memref<8x1xf32, #tpu.memory_space<vmem>>, vector<8x1xf32>,
    return
  }
  func.func @transform_0(%arg0: i32) -> (i32, i32) {
    %c0_i32 = arith.constant 0 : i32
    %c0_i32_0 = arith.constant 0 : i32
    return %arg0, %c0_i32 : i32, i32
  }
  func.func @transform_1(%arg0: i32) -> (i32, i32) {
    %c0_i32 = arith.constant 0 : i32
    %c0_i32_0 = arith.constant 0 : i32
    %c0_i32_1 = arith.constant 0 : i32
    return %c0_i32, %c0_i32_0 : i32, i32
  }
  func.func @transform_2(%arg0: i32) -> (i32, i32) {
    %c0_i32 = arith.constant 0 : i32
    %c0_i32_0 = arith.constant 0 : i32
    %c0_i32_1 = arith.constant 0 : i32
    return %c0_i32, %c0_i32_0 : i32, i32
  }
  func.func @transform_3(%arg0: i32) -> (i32, i32) {
    %c0_i32 = arith.constant 0 : i32
    %c0_i32_0 = arith.constant 0 : i32
    return %arg0, %c0_i32 : i32, i32
  }
}

</mosaic_0001>

<llo_original>
// kernel: tpu_custom_call.1
$region0: #{tpu_custom_call.1}
  #allocation0 [shape = 'u32[]', space=smem, size = 0x4, offset = 0x4, fixed_abs, tag = 'smem constant byte address 0x4 - core index']
  #allocation1 [shape = 'u32[72,128]{1,0:T(1,128)}', space=vmem, size = 0x9000, scoped, tag = 'internal scratch']
  #allocation2 [shape = 'f32[1,1]{1,0:T(1,128)S(6)}', space=smem, size = 0x200, scoped, tag = 'scoped memory for tpu_custom_call.1']
  %s0 = inlined_call_operand.hbm [shape: f32[2,1024], index: 0, kind: input, shape index: {}]
  %s1 = inlined_call_operand.hbm [shape: f32[1,1024], index: 1, kind: input, shape index: {}]
  %s2 = inlined_call_operand.<no memory space> [shape: f32[1,1], index: 2, kind: input, shape index: {}]
  %s3 = inlined_call_operand.vmem [shape: f32[2,1], index: 3, kind: output, shape index: {}]
  %s4 = sld [smem:[#allocation0]]
  $region60: #{tpu_custom_call.1} parent=0
    _
  %s6 = ssub.s32 1, %s4
  %s7 = scalar_select 0, %s6, %s4
  %8 = sst [smem:[#allocation2]] %s2
  $region1: #{tpu_custom_call.1} parent=0
    #allocation3 [shape = 'u8[32768]{0}', space=vmem, size = 0x8000, scoped, tag = 'input window, operand 0, single buffered']
    #allocation4 [shape = 's32[1]{0}', space=sflag, size = 0x4, scoped, tag = 'scoped memory for tpu_custom_call.1']
    #allocation5 [shape = 'u8[4096]{0}', space=vmem, size = 0x1000, scoped, tag = 'input window, operand 1, single buffered']
    #allocation6 [shape = 's32[1]{0}', space=sflag, size = 0x4, scoped, tag = 'scoped memory for tpu_custom_call.1']
    #allocation7 [shape = 'u8[4096]{0}', space=vmem, size = 0x1000, scoped, tag = 'output window, operand 0, single buffered']
    %9 = vsyncpa [#allocation4], 0
    %10 = vsyncpa [#allocation6], 0
    // Predicated region
    $region2: #{tpu_custom_call.1} parent=1 // pred_check
      _
    $region3: #{tpu_custom_call.1} parent=1 // pred_check_branch
      %12 = sbr.rel (0) target = $region5
    $region4: #{tpu_custom_call.1} parent=1 // pred_region
      %14 = vsyncadd [#allocation4], 768
      %s15 = sshll.u32 %s0, 4
      %s16 = int_to_ptr.hbm [resolvable:$true] %s15
      %s17 = sshll.u32 [#allocation3], 4
      %s18 = int_to_ptr.vmem [resolvable:$true] %s17
      %23 = dma.hbm_to_vmem [thread:$0]  %s16, 256, %s18, [#allocation4], 256, 256, 16
    $region5: #{tpu_custom_call.1} parent=1 // pred_fallthru
      _
    // Predicated region
    $region6: #{tpu_custom_call.1} parent=1 // pred_check
      _
    $region7: #{tpu_custom_call.1} parent=1 // pred_check_branch
      %25 = sbr.rel (0) target = $region9
    $region8: #{tpu_custom_call.1} parent=1 // pred_region
      %27 = vsyncadd [#allocation6], 0
      %s29 = sshll.u32 %s1, 4
      %s30 = int_to_ptr.hbm [resolvable:$true] %s29
      %s31 = sshll.u32 [#allocation5], 4
      %s32 = int_to_ptr.vmem [resolvable:$true] %s31
      %34 = dma.hbm_to_vmem [thread:$0]  %s30, 128, %s32, [#allocation6]
    $region9: #{tpu_custom_call.1} parent=1 // pred_fallthru
      _
    // Predicated region
    $region10: #{tpu_custom_call.1} parent=1 // pred_check
      _
    $region11: #{tpu_custom_call.1} parent=1 // pred_check_branch
      %36 = sbr.rel (0) target = $region13
    $region12: #{tpu_custom_call.1} parent=1 // pred_region
      _
    $region13: #{tpu_custom_call.1} parent=1 // pred_fallthru
      _
    // Predicated region
    $region14: #{tpu_custom_call.1} parent=1 // pred_check
      _
    $region15: #{tpu_custom_call.1} parent=1 // pred_check_branch
      %38 = sbr.rel (0) target = $region17
    $region16: #{tpu_custom_call.1} parent=1 // pred_region
      %40 = dma.done [#allocation4], 1024
    $region17: #{tpu_custom_call.1} parent=1 // pred_fallthru
      _
    // Predicated region
    $region18: #{tpu_custom_call.1} parent=1 // pred_check
      _
    $region19: #{tpu_custom_call.1} parent=1 // pred_check_branch
      %42 = sbr.rel (0) target = $region21
    $region20: #{tpu_custom_call.1} parent=1 // pred_region
      %44 = dma.done [#allocation6], 128
    $region21: #{tpu_custom_call.1} parent=1 // pred_fallthru
      _
    %v45 = vld [vmem:[#allocation3] sm:$0xff]
    %v46 = vld [vmem:[#allocation3 + $0x8] sm:$0xff]
    %v47 = vld [vmem:[#allocation3 + $0x10] sm:$0xff]
    %v48 = vld [vmem:[#allocation3 + $0x18] sm:$0xff]
    %v49 = vld [vmem:[#allocation3 + $0x20] sm:$0xff]
    %v50 = vld [vmem:[#allocation3 + $0x28] sm:$0xff]
    %v51 = vld [vmem:[#allocation3 + $0x30] sm:$0xff]
    %v52 = vld [vmem:[#allocation3 + $0x38] sm:$0xff]
    %v53 = vld [vmem:[#allocation5] sm:$0xff]
    %v55 = vperm.slane %v53, 0
    %v56 = vperm.slane %v53, 1
    %v57 = vperm.slane %v53, 2
    %v58 = vperm.slane %v53, 3
    %v59 = vperm.slane %v53, 4
    %v60 = vperm.slane %v53, 5
    %v61 = vperm.slane %v53, 6
    %v62 = vperm.slane %v53, 7
    %v63 = vrot.slane %v56, 6
    %v64 = vrot.slane %v57, 4
    %v65 = vrot.slane %v58, 2
    %v66 = vrot.slane %v60, 6
    %v67 = vrot.slane %v61, 4
    %v68 = vrot.slane %v62, 2
    %vm69 = vcmask 1041408
    %v70 = vsel %vm69, %v55, %v63
    %vm71 = vcmask 1045508
    %v72 = vsel %vm71, %v64, %v65
    %vm73 = vcmask 1043456
    %v74 = vsel %vm73, %v70, %v72
    %v75 = vsel %vm69, %v59, %v66
    %v76 = vsel %vm71, %v67, %v68
    %v77 = vsel %vm73, %v75, %v76
    %vm78 = vcmask 1043458
    %v79 = vsel %vm78, %v55, %v63
    %vm80 = vcmask 1045504
    %v81 = vsel %vm80, %v65, %v64
    %vm82 = vcmask 1045506
    %v83 = vsel %vm82, %v79, %v81
    %v84 = vrot.slane %v83, 2
    %v85 = vsel %vm78, %v59, %v66
    %v86 = vsel %vm80, %v68, %v67
    %v87 = vsel %vm82, %v85, %v86
    %v88 = vrot.slane %v87, 2
    %v89 = vsel %vm71, %v55, %v63
    %v90 = vsel %vm69, %v64, %v65
    %v91 = vsel %vm73, %v90, %v89
    %v92 = vrot.slane %v91, 4
    %v93 = vsel %vm71, %v59, %v66
    %v94 = vsel %vm69, %v67, %v68
    %v95 = vsel %vm73, %v94, %v93
    %v96 = vrot.slane %v95, 4
    %v97 = vsel %vm80, %v63, %v55
    %v98 = vsel %vm78, %v64, %v65
    %v99 = vsel %vm82, %v98, %v97
    %v100 = vrot.slane %v99, 6
    %v101 = vsel %vm80, %v66, %v59
    %v102 = vsel %vm78, %v67, %v68
    %v103 = vsel %vm82, %v102, %v101
    %v104 = vrot.slane %v103, 6
    %v113 = vmul.f32 %v45, %v74
    %v114 = vmul.f32 %v46, %v77
    %v115 = vmul.f32 %v47, %v84
    %v116 = vmul.f32 %v48, %v88
    %v117 = vmul.f32 %v49, %v92
    %v118 = vmul.f32 %v50, %v96
    %v119 = vmul.f32 %v51, %v100
    %v120 = vmul.f32 %v52, %v104
    %129 = vst [vmem:[#allocation1] ss:$4 sm:$0xff] %v113
    %s130 = scalar_lea.vmem [#allocation1], 1
    %131 = vst [vmem:[%s130] ss:$4 sm:$0xff] %v115
    %s132 = scalar_lea.vmem [#allocation1], 2
    %133 = vst [vmem:[%s132] ss:$4 sm:$0xff] %v117
    %s134 = scalar_lea.vmem [#allocation1], 3
    %135 = vst [vmem:[%s134] ss:$4 sm:$0xff] %v119
    %s136 = scalar_lea.vmem [#allocation1], 32
    %137 = vst [vmem:[%s136] ss:$4 sm:$0xff] %v114
    %s138 = scalar_lea.vmem [#allocation1], 33
    %139 = vst [vmem:[%s138] ss:$4 sm:$0xff] %v116
    %s140 = scalar_lea.vmem [#allocation1], 34
    %141 = vst [vmem:[%s140] ss:$4 sm:$0xff] %v118
    %s142 = scalar_lea.vmem [#allocation1], 35
    %143 = vst [vmem:[%s142] ss:$4 sm:$0xff] %v120
    %v144 = vld.sshfl [vmem:[#allocation1] sm:$0xff pattern:$0x73625140]
    %v145 = vld.sshfl [vmem:[#allocation1 + $0x8] sm:$0xff pattern:$0x73625140]
    %v146 = vld.sshfl [vmem:[#allocation1 + $0x10] sm:$0xff pattern:$0x73625140]
    %v147 = vld.sshfl [vmem:[#allocation1 + $0x18] sm:$0xff pattern:$0x73625140]
    %v148 = vld.sshfl [vmem:[#allocation1 + $0x20] sm:$0xff pattern:$0x73625140]
    %v149 = vld.sshfl [vmem:[#allocation1 + $0x28] sm:$0xff pattern:$0x73625140]
    %v150 = vld.sshfl [vmem:[#allocation1 + $0x30] sm:$0xff pattern:$0x73625140]
    %v151 = vld.sshfl [vmem:[#allocation1 + $0x38] sm:$0xff pattern:$0x73625140]
    %v160 = vadd.f32 %v144, %v145
    %v161 = vadd.f32 %v160, %v146
    %v162 = vadd.f32 %v161, %v147
    %v163 = vadd.f32 %v162, %v148
    %v164 = vadd.f32 %v163, %v149
    %v165 = vadd.f32 %v164, %v150
    %v166 = vadd.f32 %v165, %v151
    %167 = vadd.xlane.f32.xlu0 %v166
    %v168 = vpop.xlane.xlu0 %167
    %s169 = sld [smem:[#allocation2]]
    %v170 = vstv %s169
    %v171 = vadd.f32 %v168, %v170
    %v172 = vxor.u32 %v171, 2147483648
    %v173 = vmul.f32 %v172, 1.442695
    %v174 = vpow.pop %v173
    %v175 = vadd.f32 %v174, 1.0
    %v176 = vrcp.pop %v175
    %v177 = vmul.f32 %v175, %v176
    %v178 = vsub.f32 1.0, %v177
    %v179 = vmul.f32 %v176, %v178
    %v180 = vadd.f32 %v176, %v179
    %vm181 = vweird.f32 %v175
    %vm182 = vweird.f32 %v176
    %vm183 = vmor %vm181, %vm182
    %v184 = vsel %vm183, %v176, %v180
    %v185 = vand.u32 2147483647, %v175
    %vm186 = vcmp.eq.f32.partialorder %v185, 8.507059e+37
    %v187 = vand.u32 %v175, 2147483648
    %v188 = vor.u32 1.1754944e-38, %v187
    %v189 = vsel %vm186, %v188, %v184
    %v190 = vmul.f32 1.0, %v189
    %vm191 = vcmask 7168
    %192 = vst.msk [vmem:[#allocation7] sm:$0xff] %vm191, %v190
    // Predicated region
    $region22: #{tpu_custom_call.1} parent=1 // pred_check
      _
    $region23: #{tpu_custom_call.1} parent=1 // pred_check_branch
      %194 = sbr.rel (0) target = $region25
    $region24: #{tpu_custom_call.1} parent=1 // pred_region
      // Predicated region
      $region26: #{tpu_custom_call.1} parent=24 // pred_check
        _
      $region27: #{tpu_custom_call.1} parent=24 // pred_check_branch
        %196 = sbr.rel (0) target = $region29
      $region28: #{tpu_custom_call.1} parent=24 // pred_region
        // Predicated region
        $region30: #{tpu_custom_call.1} parent=28 // pred_check
          _
        $region31: #{tpu_custom_call.1} parent=28 // pred_check_branch
          %198 = sbr.rel target = $region33
        $region32: #{tpu_custom_call.1} parent=28 // pred_region
          // Predicated region
          $region45: #{tpu_custom_call.1} parent=32 // pred_check
            _
          $region46: #{tpu_custom_call.1} parent=32 // pred_check_branch
            %214 = sbr.rel (0) target = $region48
          $region47: #{tpu_custom_call.1} parent=32 // pred_region
            %s216 = ssub.s32 4, 1
            loop: start=0, step=1, limit=1
            $region49: #{tpu_custom_call.1} parent=47 // loop_pre_header
              _
            $region50: #{tpu_custom_call.1} parent=47 // loop_header
              %s218 = sphi 0, %s222
              %p219 = scmp.ge.s32.totalorder %s218, 1
              %s223 = sphi [#allocation7], [#allocation7]
              %s224 = sphi %s3, %s3
            $region51: #{tpu_custom_call.1} parent=47 // loop_header_branch
              %221 = sbr.rel (%p219) target = $region55
            $region52: #{tpu_custom_call.1} parent=47 // loop_body
              %v225 = vld [vmem:[%s223] sm:%s216]
              %226 = vst [vmem:[%s224] sm:%s216] %v225
            $region53: #{tpu_custom_call.1} parent=47 // loop_footer
              %s222 = sadd.s32 1, %s218
            $region54: #{tpu_custom_call.1} parent=47 // loop_footer_branch
              %217 = sbr.rel target = $region50
            $region55: #{tpu_custom_call.1} parent=47 // loop_exit
              _
          $region48: #{tpu_custom_call.1} parent=32 // pred_fallthru
            _
        $region33: #{tpu_custom_call.1} parent=28 // pred_fallthru
          _
        // Predicated region
        $region34: #{tpu_custom_call.1} parent=28 // pred_check
          _
        $region35: #{tpu_custom_call.1} parent=28 // pred_check_branch
          %200 = sbr.rel (0) target = $region37
        $region36: #{tpu_custom_call.1} parent=28 // pred_region
          %s202 = ssub.s32 4, 1
          loop: start=0, step=1, limit=1
          $region38: #{tpu_custom_call.1} parent=36 // loop_pre_header
            _
          $region39: #{tpu_custom_call.1} parent=36 // loop_header
            %s204 = sphi 0, %s208
            %p205 = scmp.ge.s32.totalorder %s204, 1
            %s209 = sphi [#allocation7], [#allocation7]
            %s210 = sphi %s3, %s3
          $region40: #{tpu_custom_call.1} parent=36 // loop_header_branch
            %207 = sbr.rel (%p205) target = $region44
          $region41: #{tpu_custom_call.1} parent=36 // loop_body
            %v211 = vld [vmem:[%s209] sm:%s202]
            %212 = vst [vmem:[%s210] sm:%s202] %v211
          $region42: #{tpu_custom_call.1} parent=36 // loop_footer
            %s208 = sadd.s32 1, %s204
          $region43: #{tpu_custom_call.1} parent=36 // loop_footer_branch
            %203 = sbr.rel target = $region39
          $region44: #{tpu_custom_call.1} parent=36 // loop_exit
            _
        $region37: #{tpu_custom_call.1} parent=28 // pred_fallthru
          _
      $region29: #{tpu_custom_call.1} parent=24 // pred_fallthru
        _
      %227 = vnop
    $region25: #{tpu_custom_call.1} parent=1 // pred_fallthru
      _
    // Predicated region
    $region56: #{tpu_custom_call.1} parent=1 // pred_check
      _
    $region57: #{tpu_custom_call.1} parent=1 // pred_check_branch
      %229 = sbr.rel (0) target = $region59
    $region58: #{tpu_custom_call.1} parent=1 // pred_region
      _
    $region59: #{tpu_custom_call.1} parent=1 // pred_fallthru
      _
    %230 = vsyncpa [#allocation4], 1
    %231 = vsyncpa [#allocation6], 1

</llo_original>
